<compile_context>
chip_gen: v7x
topology: tpu7x:2x2x1
jax: 0.10.0
libtpu: 0.0.40
codegen_flags: <defaults>
</compile_context>

<pallas_src>
import math

import jax
import jax.numpy as jnp
from jax.experimental import pallas as pl
from jax.experimental.pallas import tpu as pltpu


_MIN_GRID_STEPS = 8          # keep pipeline depth / both v7x TensorCores busy
_MAX_PERIOD_ROWS = 512       # cap on the periodic gamma/beta slab height


def _film_kernel_flat(gb_ref, x_ref, o_ref):
    """gb_ref: (1, 2, tl) f32 ; x_ref / o_ref: (1, ts, tl) in x.dtype."""
    gb = gb_ref[0]                                          # (2, tl) f32
    o_ref[0] = (x_ref[0] * gb[0:1] + gb[1:2]).astype(o_ref.dtype)


def _film_kernel_periodic(gb_ref, x_ref, o_ref):
    """gb_ref: (1, 2, P, 128) f32 ; x_ref / o_ref: (1, ts, 128), ts % P == 0."""
    _, ts, lanes = x_ref.shape
    p = gb_ref.shape[2]
    g = gb_ref[0, 0]                                        # (P, 128) f32
    b = gb_ref[0, 1]                                        # (P, 128) f32
    xr = x_ref[0].reshape(ts // p, p, lanes)                # tile-aligned split
    o_ref[0] = (xr * g + b).reshape(ts, lanes).astype(o_ref.dtype)


def _vmem_capacity_bytes(default=64 << 20):
    """Best-effort VMEM capacity query; safe default works on every TPU gen."""
    try:
        info = pltpu.get_tpu_info()
        for attr in ("vmem_capacity_bytes", "vmem_size_bytes"):
            cap = getattr(info, attr, None)
            if cap:
                return int(cap)
    except Exception:
        pass
    return default


def film(x, conditioning, params, film_switch=True, *,
         target_block_bytes=None, vmem_limit_bytes=None, donate_x=False):
    """FiLM forward. x: (B, ..., C) channels-last; conditioning: (B, D).

    params = (wg, bg, wb, bb) with torch nn.Linear layout: w*: (C, D), b*: (C,).
    """
    if not film_switch:
        return x

    wg, bg, wb, bb = params
    orig_shape = x.shape
    B, C = x.shape[0], x.shape[-1]
    S = 1
    for d in x.shape[1:-1]:
        S *= d

    # ---- gamma/beta projection: one fused XLA matmul, kept in f32.
    w_cat = jnp.concatenate([wg.T, wb.T], axis=1).astype(jnp.float32)   # (D, 2C)
    b_cat = jnp.concatenate([bg, bb]).astype(jnp.float32)               # (2C,)
    gb_proj = conditioning.astype(jnp.float32) @ w_cat + b_cat          # (B, 2C)
    gamma, beta = gb_proj[:, :C], gb_proj[:, C:]                        # (B, C) f32

    x_bytes = jnp.dtype(x.dtype).itemsize
    sub_x = max(8, 32 // x_bytes)          # sublane packing of x dtype (8/16/32)

    # ---- per-generation VMEM budget: ~48 MiB limit / ~8 MiB blocks on v7x
    # (64 MiB VMEM), 64 MiB limit on v5e/v6e (128 MiB VMEM).
    vmem_cap = _vmem_capacity_bytes()
    if vmem_limit_bytes is None:
        vmem_limit_bytes = min(64 << 20, max(32 << 20, (vmem_cap * 3) // 4))
    if target_block_bytes is None:
        target_block_bytes = min(8 << 20, max(1 << 20, vmem_limit_bytes // 6))

    # ---- layout selection: lane-dense (last dim multiple of 128) when possible.
    periodic = False
    period = 1
    if C % 128 == 0:
        L, rows = C, S                                      # already lane-dense
    else:
        p_chan = C // math.gcd(C, 128)                      # 128-lane rows per channel cycle
        period = (p_chan * sub_x) // math.gcd(p_chan, sub_x)  # lcm(p_chan, sub_x)
        rows128 = (S * C) // 128
        if (S * C) % 128 == 0 and period <= min(rows128, _MAX_PERIOD_ROWS):
            # Periodic lane-dense repack: channel of (row r, lane l) is
            # (128*r + l) % C, repeating every `period` rows.
            periodic = True
            L, rows = 128, rows128
            reps = (period * 128) // C
            gamma = jnp.tile(gamma, (1, reps)).reshape(B, period, 128)
            beta = jnp.tile(beta, (1, reps)).reshape(B, period, 128)
        else:
            L, rows = C, S                                  # fallback: masked stores
            period = 1

    gb = jnp.stack([gamma, beta], axis=1)   # (B, 2, C) or (B, 2, period, 128), f32
    x_flat = x.reshape(B, rows, L)

    # ---- tiling.
    unit = period if periodic else sub_x

    # Lane-axis tiling: only when a single sublane-row slab already exceeds the
    # block budget (very large C); keeps blocks at target size on every gen.
    if (not periodic) and L % 128 == 0 and unit * L * x_bytes > target_block_bytes:
        tl = max(128, (target_block_bytes // (unit * x_bytes)) // 128 * 128)
    else:
        tl = L
    num_lane_tiles = pl.cdiv(L, tl)

    # Row tiling: fill the byte budget, cap so the grid keeps >= ~8 total steps
    # (pipeline depth + both v7x TCs), then clamp to the array extent.
    ts = max(unit, (target_block_bytes // (tl * x_bytes)) // unit * unit)
    min_row_tiles = -(-_MIN_GRID_STEPS // max(1, B * num_lane_tiles))
    ts_depth = -(-rows // min_row_tiles)                    # ceil
    ts_depth = max(unit, -(-ts_depth // unit) * unit)       # round up to unit
    ts = min(ts, ts_depth)
    if rows >= unit:
        ts = min(ts, (rows // unit) * unit)
    else:
        ts = rows                                           # full extent: always legal
    num_row_tiles = pl.cdiv(rows, ts)

    if periodic:
        kernel = _film_kernel_periodic
        gb_spec = pl.BlockSpec((1, 2, period, 128), lambda b, s, l: (b, 0, 0, 0))
    else:
        kernel = _film_kernel_flat
        gb_spec = pl.BlockSpec((1, 2, tl), lambda b, s, l: (b, 0, l))

    flops = 2 * B * S * C
    bytes_accessed = 2 * B * rows * L * x_bytes + int(gb.size) * 4

    out_flat = pl.pallas_call(
        kernel,
        out_shape=jax.ShapeDtypeStruct((B, rows, L), x.dtype),
        grid_spec=pltpu.PrefetchScalarGridSpec(
            num_scalar_prefetch=0,
            grid=(B, num_row_tiles, num_lane_tiles),
            in_specs=[
                gb_spec,
                pl.BlockSpec((1, ts, tl), lambda b, s, l: (b, s, l)),
            ],
            out_specs=pl.BlockSpec((1, ts, tl), lambda b, s, l: (b, s, l)),
        ),
        compiler_params=pltpu.CompilerParams(
            dimension_semantics=("parallel", "parallel", "arbitrary"),
            vmem_limit_bytes=vmem_limit_bytes,
        ),
        cost_estimate=pl.CostEstimate(
            flops=flops, transcendentals=0, bytes_accessed=bytes_accessed),
        input_output_aliases=({1: 0} if donate_x else {}),
    )(gb, x_flat)

    return out_flat.reshape(orig_shape)


def init_film_params(key, input_size, conditioning_size):
    """Deterministic init matching nn.Linear shapes (uniform +-1/sqrt(fan_in))."""
    k1, k2, k3, k4 = jax.random.split(key, 4)
    bound = 1.0 / jnp.sqrt(conditioning_size)
    wg = jax.random.uniform(k1, (input_size, conditioning_size),
                            jnp.float32, -bound, bound)
    bg = jax.random.uniform(k2, (input_size,), jnp.float32, -bound, bound)
    wb = jax.random.uniform(k3, (input_size, conditioning_size),
                            jnp.float32, -bound, bound)
    bb = jax.random.uniform(k4, (input_size,), jnp.float32, -bound, bound)
    return (wg, bg, wb, bb)


def _film_ref(x, conditioning, params):
    """Pure-JAX reference mirroring the PyTorch forward (channels-last x)."""
    wg, bg, wb, bb = params
    gamma = conditioning @ wg.T + bg    # (B, C)
    beta = conditioning @ wb.T + bb     # (B, C)
    shape = (gamma.shape[0],) + (1,) * (x.ndim - 2) + (gamma.shape[1],)
    return x * gamma.reshape(shape) + beta.reshape(shape)


if __name__ == "__main__":
    root = jax.random.PRNGKey(0)
    kx, kc, kp, kx2, kc2, kp2, kx3, kc3, kp3, kx4, kx5, kc5, kp5 = \
        jax.random.split(root, 13)

    def check(name, x, cond, params, **kw):
        out = jax.block_until_ready(film(x, cond, params, film_switch=True, **kw))
        ref = _film_ref(x.astype(jnp.float32), cond, params)
        assert out.shape == x.shape and out.dtype == x.dtype, name
        tol = 5e-2 if x.dtype == jnp.bfloat16 else 1e-5
        assert jnp.allclose(out.astype(jnp.float32), ref, atol=tol, rtol=tol), \
            f"mismatch vs reference: {name}"

    D = 32

    # 1) Main case: 4D, C=16 (periodic lane-dense repack, P=1 -> period=sublanes).
    x1 = jax.random.normal(kx, (2, 8, 8, 16), jnp.float32)
    c1 = jax.random.normal(kc, (2, D), jnp.float32)
    p1 = init_film_params(kp, 16, D)
    check("4d_c16", x1, c1, p1)

    # film_switch=False passthrough.
    assert jnp.array_equal(film(x1, c1, p1, film_switch=False), x1)

    # 2) Awkward C=96: generalized periodic lane-dense path (period=24, ragged tail).
    x2 = jax.random.normal(kx2, (2, 12, 12, 96), jnp.float32)
    c2 = jax.random.normal(kc2, (2, D), jnp.float32)
    p2 = init_film_params(kp2, 96, D)
    check("4d_c96_periodic", x2, c2, p2)

    # 3) Fallback path (C=5, S*C not a multiple of 128): masked stores, full-extent block.
    x3 = jax.random.normal(kx3, (2, 7, 5), jnp.float32)
    c3 = jax.random.normal(kc3, (2, D), jnp.float32)
    p3 = init_film_params(kp3, 5, D)
    check("3d_c5_fallback", x3, c3, p3)

    # 4) bf16 activations (f32 gamma/beta, promote-in-kernel, cast on store).
    x4 = jax.random.normal(kx4, (2, 128, 16), jnp.float32).astype(jnp.bfloat16)
    check("3d_c16_bf16", x4, c1, p1)

    # 5) Lane-axis tiling path (C=256 with a tiny forced block budget).
    x5 = jax.random.normal(kx5, (2, 16, 256), jnp.float32)
    c5 = jax.random.normal(kc5, (2, D), jnp.float32)
    p5 = init_film_params(kp5, 256, D)
    check("3d_c256_lane_tiled", x5, c5, p5, target_block_bytes=4096)

    print("KERNEL_OK")
</pallas_src>

<mosaic_0001>
module attributes {stable_mosaic.version = 11 : i64} {
  func.func @_film_kernel_periodic(%arg0: i32, %arg1: i32, %arg2: i32, %arg3: memref<1x2x8x128xf32, #tpu.memory_space<vmem>>, %arg4: memref<1x8x128xf32, #tpu.memory_space<vmem>>, %arg5: memref<1x8x128xf32, #tpu.memory_space<vmem>>) attributes {dimension_semantics = [#tpu.dimension_semantics<parallel>, #tpu.dimension_semantics<parallel>, #tpu.dimension_semantics<arbitrary>], iteration_bounds = array<i64: 2, 1, 1>, scalar_prefetch = 0 : i64, scratch_operands = 0 : i64, tpu.core_type = #tpu.core_type<tc>, window_params = [{transform_indices = @transform_0, window_bounds = array<i64: 1, 2, 8, 128>}, {transform_indices = @transform_1, window_bounds = array<i64: 1, 8, 128>}, {transform_indices = @transform_2, window_bounds = array<i64: 1, 8, 128>}]} {
    %c0 = arith.constant 0 : index
    %c0_0 = arith.constant 0 : index
    %c0_1 = arith.constant 0 : index
    %c0_2 = arith.constant 0 : index
    %0 = vector.load %arg3[%c0, %c0_0, %c0_1, %c0_2] : memref<1x2x8x128xf32, #tpu.memory_space<vmem>>, vector<1x1x8x128xf32>
    %1 = vector.shape_cast %0 : vector<1x1x8x128xf32> to vector<8x128xf32>
    %c0_3 = arith.constant 0 : index
    %c1 = arith.constant 1 : index
    %c0_4 = arith.constant 0 : index
    %c0_5 = arith.constant 0 : index
    %2 = vector.load %arg3[%c0_3, %c1, %c0_4, %c0_5] : memref<1x2x8x128xf32, #tpu.memory_space<vmem>>, vector<1x1x8x128xf32>
    %3 = vector.shape_cast %2 : vector<1x1x8x128xf32> to vector<8x128xf32>
    %c0_6 = arith.constant 0 : index
    %c0_7 = arith.constant 0 : index
    %c0_8 = arith.constant 0 : index
    %4 = vector.load %arg4[%c0_6, %c0_7, %c0_8] : memref<1x8x128xf32, #tpu.memory_space<vmem>>, vector<1x8x128xf32>
    %5 = vector.shape_cast %4 : vector<1x8x128xf32> to vector<8x128xf32>
    %6 = vector.shape_cast %5 : vector<8x128xf32> to vector<1x8x128xf32>
    %7 = vector.shape_cast %1 : vector<8x128xf32> to vector<1x8x128xf32>
    %8 = arith.mulf %6, %7 : vector<1x8x128xf32>
    %9 = vector.shape_cast %3 : vector<8x128xf32> to vector<1x8x128xf32>
    %10 = arith.addf %8, %9 : vector<1x8x128xf32>
    %11 = vector.shape_cast %10 : vector<1x8x128xf32> to vector<8x128xf32>
    %c0_9 = arith.constant 0 : index
    %c0_10 = arith.constant 0 : index
    %c0_11 = arith.constant 0 : index
    %12 = vector.load %arg5[%c0_9, %c0_10, %c0_11] : memref<1x8x128xf32, #tpu.memory_space<vmem>>, vector<1x8x128xf32>
    %13 = vector.shape_cast %12 : vector<1x8x128xf32> to vector<8x128xf32>
    %14 = vector.shape_cast %11 : vector<8x128xf32> to vector<1x8x128xf32>
    tpu.vector_store %arg5[%c0_9, %c0_10, %c0_11], %14 {strides = array<i32>} : memref<1x8x128xf32, #tpu.memory_space<vmem>>, vector<1x8x128xf32>,
    return
  }
  func.func @transform_0(%arg0: i32, %arg1: i32, %arg2: i32) -> (i32, i32, i32, i32) {
    %c0_i32 = arith.constant 0 : i32
    %c0_i32_0 = arith.constant 0 : i32
    %c0_i32_1 = arith.constant 0 : i32
    %c0_i32_2 = arith.constant 0 : i32
    return %arg0, %c0_i32, %c0_i32_0, %c0_i32_1 : i32, i32, i32, i32
  }
  func.func @transform_1(%arg0: i32, %arg1: i32, %arg2: i32) -> (i32, i32, i32) {
    %c0_i32 = arith.constant 0 : i32
    return %arg0, %arg1, %arg2 : i32, i32, i32
  }
  func.func @transform_2(%arg0: i32, %arg1: i32, %arg2: i32) -> (i32, i32, i32) {
    %c0_i32 = arith.constant 0 : i32
    return %arg0, %arg1, %arg2 : i32, i32, i32
  }
}

</mosaic_0001>

<llo_original>
// kernel: tpu_custom_call.1
$region0: #{tpu_custom_call.1}
  #allocation0 [shape = 'u32[]', space=smem, size = 0x4, offset = 0x4, fixed_abs, tag = 'smem constant byte address 0x4 - core index']
  #allocation1 [shape = 'u32[144,128]{1,0:T(1,128)}', space=vmem, size = 0x12000, scoped, tag = 'internal scratch']
  %s0 = inlined_call_operand.hbm [shape: f32[2,2,8,128], index: 0, kind: input, shape index: {}]
  %s1 = inlined_call_operand.hbm [shape: f32[2,8,128], index: 1, kind: input, shape index: {}]
  %s2 = inlined_call_operand.hbm [shape: f32[2,8,128], index: 2, kind: output, shape index: {}]
  %s3 = sld [smem:[#allocation0]]
  $region49: #{tpu_custom_call.1} parent=0
    _
  %s5 = ssub.s32 1, %s3
  %s6 = scalar_select 0, %s5, %s3
  $region1: #{tpu_custom_call.1} parent=0
    #allocation2 [shape = 'u8[16384]{0}', space=vmem, size = 0x4000, scoped, tag = 'input window, operand 0']
    #allocation3 [shape = 's32[2]{0}', space=sflag, size = 0x8, scoped, tag = 'scoped memory for tpu_custom_call.1']
    #allocation4 [shape = 's32[2]{0}', space=sflag, size = 0x8, scoped, tag = 'scoped memory for tpu_custom_call.1']
    #allocation5 [shape = 'u8[8192]{0}', space=vmem, size = 0x2000, scoped, tag = 'input window, operand 1']
    #allocation6 [shape = 's32[2]{0}', space=sflag, size = 0x8, scoped, tag = 'scoped memory for tpu_custom_call.1']
    #allocation7 [shape = 'u8[8192]{0}', space=vmem, size = 0x2000, scoped, tag = 'output window, operand 0']
    %7 = vsyncpa [#allocation3], 0
    %s8 = scalar_lea.sflag [#allocation3], 1
    %9 = vsyncpa %s8, 0
    %10 = vsyncpa [#allocation6], 0
    %s11 = scalar_lea.sflag [#allocation6], 1
    %12 = vsyncpa %s11, 0
    %13 = vsyncpa [#allocation4], 0
    %s14 = scalar_lea.sflag [#allocation4], 1
    %15 = vsyncpa %s14, 0
    loop: start=0, step=1, limit=4
    $region2: #{tpu_custom_call.1} parent=1 // loop_pre_header
      _
    $region3: #{tpu_custom_call.1} parent=1 // loop_header
      %s17 = sphi 0, %s21
      %p18 = scmp.ge.s32.totalorder %s17, 4
      %s24 = sphi 0, %s43
      %s25 = sphi 0, %s39
      %s26 = sphi 0, %s35
      %s27 = sphi 0, %s24
      %s28 = sphi 0, %s25
      %s29 = sphi 0, %s26
      %s30 = sphi 0, %s27
      %s31 = sphi 0, %s28
      %s32 = sphi 0, %s29
      %s46 = sphi 0, %s48
      %s49 = sphi 0, %s46
      %s50 = sphi 0, %s49
      %s66 = sphi 0, %s50
      %s76 = sphi 0, %s78
      %s79 = sphi 0, %s76
      %s80 = sphi 0, %s79
      %s96 = sphi 0, %s80
      %s106 = sphi 0, %s108
      %s109 = sphi 0, %s106
      %s110 = sphi 0, %s109
      %s126 = sphi 0, %s110
    $region4: #{tpu_custom_call.1} parent=1 // loop_header_branch
      %20 = sbr.rel (%p18) target = $region8
    $region5: #{tpu_custom_call.1} parent=1 // loop_body
      %s22 = ssub.s32 %s17, 1
      %s23 = ssub.s32 %s17, 2
      %s33 = sadd.s32 1, %s26
      %p34 = scmp.ge.s32.totalorder %s33, 1
      %s35 = scalar_select %p34, 0, %s33
      %s36 = sadd.s32 1, %s25
      %s37 = scalar_select %p34, %s36, %s25
      %p38 = scmp.ge.s32.totalorder %s37, 1
      %s39 = scalar_select %p38, 0, %s37
      %s40 = sadd.s32 1, %s24
      %s41 = scalar_select %p38, %s40, %s24
      %p42 = scmp.ge.s32.totalorder %s41, 2
      %s43 = scalar_select %p42, 0, %s41
      %s44 = ssub.s32 %s24, %s43
      %p45 = scmp.eq.s32.totalorder %s44, 0
      %s47 = sadd.s32 %s46, 1
      %s48 = scalar_select %p45, %s46, %s47
      %p51 = pneg %p45
      %p52 = scmp.eq.s32.totalorder %s17, 1
      %p53 = por %p51, %p52
      %p54 = scmp.ne.s32.totalorder %s46, %s49
      %p55 = scmp.eq.s32.totalorder %s17, 0
      %p56 = por %p54, %p55
      %p57 = scmp.ne.s32.totalorder %s46, %s49
      %p58 = scmp.eq.s32.totalorder %s22, 1
      %p59 = por %p57, %p58
      %p60 = scmp.ne.s32.totalorder %s49, %s50
      %p61 = scmp.eq.s32.totalorder %s22, 0
      %p62 = por %p60, %p61
      %p63 = scmp.ne.s32.totalorder %s49, %s50
      %p64 = scmp.eq.s32.totalorder %s23, 1
      %p65 = por %p63, %p64
      %p67 = scmp.ne.s32.totalorder %s50, %s66
      %p68 = scmp.eq.s32.totalorder %s23, 0
      %p69 = por %p67, %p68
      %s70 = ssub.s32 %s24, %s43
      %s71 = ssub.s32 %s25, %s39
      %s72 = sor.u32 %s70, %s71
      %s73 = ssub.s32 %s26, %s35
      %s74 = sor.u32 %s72, %s73
      %p75 = scmp.eq.s32.totalorder %s74, 0
      %s77 = sadd.s32 %s76, 1
      %s78 = scalar_select %p75, %s76, %s77
      %p81 = pneg %p75
      %p82 = scmp.eq.s32.totalorder %s17, 1
      %p83 = por %p81, %p82
      %p84 = scmp.ne.s32.totalorder %s76, %s79
      %p85 = scmp.eq.s32.totalorder %s17, 0
      %p86 = por %p84, %p85
      %p87 = scmp.ne.s32.totalorder %s76, %s79
      %p88 = scmp.eq.s32.totalorder %s22, 1
      %p89 = por %p87, %p88
      %p90 = scmp.ne.s32.totalorder %s79, %s80
      %p91 = scmp.eq.s32.totalorder %s22, 0
      %p92 = por %p90, %p91
      %p93 = scmp.ne.s32.totalorder %s79, %s80
      %p94 = scmp.eq.s32.totalorder %s23, 1
      %p95 = por %p93, %p94
      %p97 = scmp.ne.s32.totalorder %s80, %s96
      %p98 = scmp.eq.s32.totalorder %s23, 0
      %p99 = por %p97, %p98
      %s100 = ssub.s32 %s24, %s43
      %s101 = ssub.s32 %s25, %s39
      %s102 = sor.u32 %s100, %s101
      %s103 = ssub.s32 %s26, %s35
      %s104 = sor.u32 %s102, %s103
      %p105 = scmp.eq.s32.totalorder %s104, 0
      %s107 = sadd.s32 %s106, 1
      %s108 = scalar_select %p105, %s106, %s107
      %p111 = pneg %p105
      %p112 = scmp.eq.s32.totalorder %s17, 1
      %p113 = por %p111, %p112
      %p114 = scmp.ne.s32.totalorder %s106, %s109
      %p115 = scmp.eq.s32.totalorder %s17, 0
      %p116 = por %p114, %p115
      %p117 = scmp.ne.s32.totalorder %s106, %s109
      %p118 = scmp.eq.s32.totalorder %s22, 1
      %p119 = por %p117, %p118
      %p120 = scmp.ne.s32.totalorder %s109, %s110
      %p121 = scmp.eq.s32.totalorder %s22, 0
      %p122 = por %p120, %p121
      %p123 = scmp.ne.s32.totalorder %s109, %s110
      %p124 = scmp.eq.s32.totalorder %s23, 1
      %p125 = por %p123, %p124
      %p127 = scmp.ne.s32.totalorder %s110, %s126
      %p128 = scmp.eq.s32.totalorder %s23, 0
      %p129 = por %p127, %p128
      %p130 = scmp.le.s32.totalorder 1, %s17
      %p131 = scmp.lt.s32.totalorder %s17, 3
      %p132 = pnand %p130, %p131
      %p133 = pneg %p132
      // Predicated region
      $region9: #{tpu_custom_call.1} parent=5 // pred_check
        _
      $region10: #{tpu_custom_call.1} parent=5 // pred_check_branch
        %135 = sbr.rel (%p132) target = $region12
      $region11: #{tpu_custom_call.1} parent=5 // pred_region
        %s136 = ssub.s32 %s17, 1
      $region12: #{tpu_custom_call.1} parent=5 // pred_fallthru
        _
      %p137 = scmp.lt.s32.totalorder %s17, 2
      // Predicated region
      $region13: #{tpu_custom_call.1} parent=5 // pred_check
        %p138 = pneg %p137
      $region14: #{tpu_custom_call.1} parent=5 // pred_check_branch
        %140 = sbr.rel (%p138) target = $region16
      $region15: #{tpu_custom_call.1} parent=5 // pred_region
        // Predicated region
        $region17: #{tpu_custom_call.1} parent=15 // pred_check
          %p141 = pneg %p56
        $region18: #{tpu_custom_call.1} parent=15 // pred_check_branch
          %143 = sbr.rel (%p141) target = $region20
        $region19: #{tpu_custom_call.1} parent=15 // pred_region
          %s144 = sand.u32 %s46, 1
          %s145 = scalar_lea.sflag [#allocation3], %s144
          %s146 = sand.u32 %s46, 1
          %s147 = smul.addr %s146, 16
          %s148 = scalar_lea.vmem [#allocation2], %s147
          %s150 = ssub.s32 256, 256
          %151 = vsyncadd %s145, %s150
          %s152 = smul.addr %s24, 2
          %s153 = smul.addr %s152, 128
          %s154 = scalar_lea.hbm %s0, %s153
          %s155 = sshll.u32 %s148, 4
          %s156 = int_to_ptr.vmem [resolvable:$true] %s155
          %161 = dma.hbm_to_vmem [thread:$0]  %s154, 256, %s156, %s145, 128, 128, 8
        $region20: #{tpu_custom_call.1} parent=15 // pred_fallthru
          _
        // Predicated region
        $region21: #{tpu_custom_call.1} parent=15 // pred_check
          %p162 = pneg %p86
        $region22: #{tpu_custom_call.1} parent=15 // pred_check_branch
          %164 = sbr.rel (%p162) target = $region24
        $region23: #{tpu_custom_call.1} parent=15 // pred_region
          %s165 = sand.u32 %s76, 1
          %s166 = scalar_lea.sflag [#allocation6], %s165
          %s167 = sand.u32 %s76, 1
          %s168 = smul.addr %s167, 8
          %s169 = scalar_lea.vmem [#allocation5], %s168
          %s171 = ssub.s32 128, 128
          %172 = vsyncadd %s166, %s171
          %s173 = sadd.s32 %s26, %s25
          %s174 = sadd.s32 %s173, %s24
          %s175 = smul.addr %s174, 128
          %s176 = scalar_lea.hbm %s1, %s175
          %s178 = sshll.u32 %s169, 4
          %s179 = int_to_ptr.vmem [resolvable:$true] %s178
          %181 = dma.hbm_to_vmem [thread:$0]  %s176, 128, %s179, %s166
        $region24: #{tpu_custom_call.1} parent=15 // pred_fallthru
          _
      $region16: #{tpu_custom_call.1} parent=5 // pred_fallthru
        _
      %p182 = scmp.le.s32.totalorder 1, %s17
      %p183 = scmp.lt.s32.totalorder %s17, 3
      %p184 = pnand %p182, %p183
      %p185 = pneg %p184
      // Predicated region
      $region25: #{tpu_custom_call.1} parent=5 // pred_check
        _
      $region26: #{tpu_custom_call.1} parent=5 // pred_check_branch
        %187 = sbr.rel (%p184) target = $region28
      $region27: #{tpu_custom_call.1} parent=5 // pred_region
        %s188 = ssub.s32 %s17, 1
        %s189 = sand.u32 %s49, 1
        %s190 = scalar_lea.sflag [#allocation3], %s189
        %s191 = sand.u32 %s49, 1
        %s192 = smul.addr %s191, 16
        %s193 = scalar_lea.vmem [#allocation2], %s192
        // Predicated region
        $region29: #{tpu_custom_call.1} parent=27 // pred_check
          %p194 = pneg %p62
        $region30: #{tpu_custom_call.1} parent=27 // pred_check_branch
          %196 = sbr.rel (%p194) target = $region32
        $region31: #{tpu_custom_call.1} parent=27 // pred_region
          %197 = dma.done %s190, 256
        $region32: #{tpu_custom_call.1} parent=27 // pred_fallthru
          _
        %s198 = sand.u32 %s79, 1
        %s199 = scalar_lea.sflag [#allocation6], %s198
        %s200 = sand.u32 %s79, 1
        %s201 = smul.addr %s200, 8
        %s202 = scalar_lea.vmem [#allocation5], %s201
        // Predicated region
        $region33: #{tpu_custom_call.1} parent=27 // pred_check
          %p203 = pneg %p92
        $region34: #{tpu_custom_call.1} parent=27 // pred_check_branch
          %205 = sbr.rel (%p203) target = $region36
        $region35: #{tpu_custom_call.1} parent=27 // pred_region
          %206 = dma.done %s199, 128
        $region36: #{tpu_custom_call.1} parent=27 // pred_fallthru
          _
        %s207 = sand.u32 %s49, 1
        %s208 = scalar_lea.sflag [#allocation3], %s207
        %s209 = sand.u32 %s49, 1
        %s210 = smul.addr %s209, 16
        %s211 = scalar_lea.vmem [#allocation2], %s210
        %p212 = pneg %p62
        %p213 = pneg %p59
        %s214 = sand.u32 %s79, 1
        %s215 = scalar_lea.sflag [#allocation6], %s214
        %s216 = sand.u32 %s79, 1
        %s217 = smul.addr %s216, 8
        %s218 = scalar_lea.vmem [#allocation5], %s217
        %p219 = pneg %p92
        %p220 = pneg %p89
        %p221 = pneg %p122
        %p222 = pneg %p119
        %s223 = sand.u32 %s109, 1
        %s224 = scalar_lea.sflag [#allocation4], %s223
        %s225 = sand.u32 %s109, 1
        %s226 = smul.addr %s225, 8
        %s227 = scalar_lea.vmem [#allocation7], %s226
        %v228 = vld [vmem:[%s193] sm:$0xff]
        %s229 = scalar_lea.vmem %s193, 8 [#allocation2]
        %v230 = vld [vmem:[%s229] sm:$0xff]
        %v231 = vld [vmem:[%s202] sm:$0xff]
        %v232 = vmul.f32 %v231, %v228
        %v233 = vadd.f32 %v232, %v230
        %234 = vst [vmem:[%s227] sm:$0xff] %v233
        %s235 = sand.u32 %s109, 1
        %s236 = scalar_lea.sflag [#allocation4], %s235
        %s237 = sand.u32 %s109, 1
        %s238 = smul.addr %s237, 8
        %s239 = scalar_lea.vmem [#allocation7], %s238
        // Predicated region
        $region37: #{tpu_custom_call.1} parent=27 // pred_check
          %p240 = pneg %p119
        $region38: #{tpu_custom_call.1} parent=27 // pred_check_branch
          %242 = sbr.rel (%p240) target = $region40
        $region39: #{tpu_custom_call.1} parent=27 // pred_region
          %s244 = ssub.s32 128, 128
          %245 = vsyncadd %s236, %s244
          %s246 = sadd.s32 %s29, %s28
          %s247 = sadd.s32 %s246, %s27
          %s248 = smul.addr %s247, 128
          %s249 = scalar_lea.hbm %s2, %s248
          %s251 = sshll.u32 %s239, 4
          %s252 = int_to_ptr.vmem [resolvable:$true] %s251
          %254 = dma.vmem_to_hbm [thread:$0]  %s252, 128, %s249, %s236
        $region40: #{tpu_custom_call.1} parent=27 // pred_fallthru
          _
      $region28: #{tpu_custom_call.1} parent=5 // pred_fallthru
        _
      %p255 = scmp.le.s32.totalorder 2, %s17
      // Predicated region
      $region41: #{tpu_custom_call.1} parent=5 // pred_check
        %p256 = pneg %p255
      $region42: #{tpu_custom_call.1} parent=5 // pred_check_branch
        %258 = sbr.rel (%p256) target = $region44
      $region43: #{tpu_custom_call.1} parent=5 // pred_region
        %s259 = ssub.s32 %s17, 2
        // Predicated region
        $region45: #{tpu_custom_call.1} parent=43 // pred_check
          %p260 = pneg %p125
        $region46: #{tpu_custom_call.1} parent=43 // pred_check_branch
          %262 = sbr.rel (%p260) target = $region48
        $region47: #{tpu_custom_call.1} parent=43 // pred_region
          %s263 = sand.u32 %s110, 1
          %s264 = scalar_lea.sflag [#allocation4], %s263
          %s265 = sand.u32 %s110, 1
          %s266 = smul.addr %s265, 8
          %s267 = scalar_lea.vmem [#allocation7], %s266
          %268 = dma.done %s264, 128
        $region48: #{tpu_custom_call.1} parent=43 // pred_fallthru
          _
      $region44: #{tpu_custom_call.1} parent=5 // pred_fallthru
        _
    $region6: #{tpu_custom_call.1} parent=1 // loop_footer
      %s21 = sadd.s32 1, %s17
    $region7: #{tpu_custom_call.1} parent=1 // loop_footer_branch
      %16 = sbr.rel target = $region3
    $region8: #{tpu_custom_call.1} parent=1 // loop_exit
      _
    %269 = vsyncpa [#allocation3], 1
    %s270 = scalar_lea.sflag [#allocation3], 1
    %271 = vsyncpa %s270, 1
    %272 = vsyncpa [#allocation6], 1
    %s273 = scalar_lea.sflag [#allocation6], 1
    %274 = vsyncpa %s273, 1
    %275 = vsyncpa [#allocation4], 1
    %s276 = scalar_lea.sflag [#allocation4], 1
    %277 = vsyncpa %s276, 1

</llo_original>
